<compile_context>
chip_gen: v6e
topology: v6e:2x2x1
jax: 0.10.0
libtpu: 0.0.40
codegen_flags: <defaults>
</compile_context>

<pallas_src>
import jax
import jax.numpy as jnp
from jax.experimental import pallas as pl
from jax.experimental.pallas import tpu as pltpu


# ----------------------------------------------------------------------------
# Kernel
# ----------------------------------------------------------------------------
def _mlp_softmax_kernel(x_ref, w1_ref, b1_ref, w2_ref, b2_ref, o_ref, h_acc):
    k = pl.program_id(1)

    @pl.when(k == 0)
    def _():
        h_acc[...] = jnp.zeros_like(h_acc)

    # fc1 (BN already folded into w1/b1): accumulate (tm, H) partial products
    # across the K (feature) tiles. bf16 MXU feeds, f32 accumulation.
    h_acc[...] += jnp.dot(x_ref[...], w1_ref[...],
                          preferred_element_type=jnp.float32)

    @pl.when(k == pl.num_programs(1) - 1)
    def _():
        # bias + ReLU in f32 (works on v5e: no bf16 VPU/EUP path needed)
        h = jnp.maximum(h_acc[...] + b1_ref[...], 0.0)

        # fc2: (tm, H)bf16 @ (H, Cp)bf16 -> f32; padded classes carry bias -1e30
        logits = jnp.dot(h.astype(jnp.bfloat16), w2_ref[...],
                         preferred_element_type=jnp.float32) + b2_ref[...]

        # TODO(synk): dropout(p=0.5) is identity in eval mode; training-mode
        # masking via pltpu.prng_* is intentionally not implemented.

        # softmax over the padded class dim, all in f32; exp(-1e30 - m) == 0 so
        # padding columns contribute nothing. Exact divide -> rows sum to 1.
        m = jnp.max(logits, axis=1, keepdims=True)
        e = jnp.exp(logits - m)
        s = jnp.sum(e, axis=1, keepdims=True)
        o_ref[...] = (e * (1.0 / s)).astype(o_ref.dtype)


# ----------------------------------------------------------------------------
# Wrapper / parameter preparation (hoisted out of the per-call path)
# ----------------------------------------------------------------------------
def _round_up(v, m):
    return ((v + m - 1) // m) * m


def _choose_batch_tiling(B, tm=None):
    if tm is not None:
        tm = max(8, _round_up(tm, 8))
        return tm, pl.cdiv(B, tm)
    if B < 16:
        return max(8, _round_up(B, 8)), 1
    # >= 2 and even grid steps so v7x's two TensorCores both get work;
    # tiles capped at 512 rows, 8-row aligned.
    gB = max(2, _round_up(pl.cdiv(B, 512), 2))
    tm = min(512, _round_up(pl.cdiv(B, gB), 8))
    return tm, gB


def _fold_and_pad_params(params, eps=1e-5):
    """Fold eval-mode BatchNorm1d into fc1 and lane-pad fc2 once (not per call)."""
    w1, b1 = params["w1"], params["b1"]
    gamma, beta = params["gamma"], params["beta"]
    run_mean, run_var = params["run_mean"], params["run_var"]
    w2, b2 = params["w2"], params["b2"]

    F, H = w1.shape
    C = w2.shape[1]

    scale = gamma / jnp.sqrt(run_var + eps)                       # (H,)
    shift = beta - run_mean * scale                               # (H,)
    w1f = (w1 * scale[None, :]).astype(jnp.bfloat16)              # (F, H)
    b1f = (b1 * scale + shift).astype(jnp.float32).reshape(1, H)  # (1, H)

    # Lane-dense class dim; beyond 128 round to a multiple of 256 for the
    # v6e/v7x 2x256x256 MXU.
    Cp = 128 if C <= 128 else _round_up(C, 256)
    w2p = jnp.zeros((H, Cp), jnp.float32).at[:, :C].set(w2).astype(jnp.bfloat16)
    b2p = jnp.full((Cp,), -1e30, jnp.float32).at[:C].set(
        b2.astype(jnp.float32)).reshape(1, Cp)

    return w1f, b1f, w2p, b2p, F, H, C, Cp


def make_multi_classification_forward(params, *, out_dtype=jnp.float32, tm=None):
    """Build a jitted forward fn with BN fold / padding / casts done once."""
    w1f, b1f, w2p, b2p, F, H, C, Cp = _fold_and_pad_params(params)

    # Feature (K) tiling: small F stays a single resident block; large F is
    # tiled in 512-column chunks with a VMEM f32 accumulator inside the kernel.
    if F <= 1024:
        tk, Fp = F, F
    else:
        tk = 512
        Fp = _round_up(F, tk)
        w1f = jnp.zeros((Fp, H), jnp.bfloat16).at[:F].set(w1f)
    gK = Fp // tk

    out_bytes = jnp.dtype(out_dtype).itemsize
    single = pl.Buffered(1)  # constant index maps -> double-buffering is pure waste

    @jax.jit
    def forward(x):
        B = x.shape[0]
        tm_, gB = _choose_batch_tiling(B, tm)
        Bp = tm_ * gB

        xp = x.astype(jnp.bfloat16)
        if Bp != B or Fp != F:
            xp = jnp.zeros((Bp, Fp), jnp.bfloat16).at[:B, :F].set(xp)

        # VMEM budget from actual buffer sizes (+2x headroom), capped at the
        # v7x physical limit of 64 MiB.
        est = (Fp * H * 2 * (2 if gK > 1 else 1)      # w1 (K-tiled -> 2 bufs)
               + H * 4 + Cp * 4 + H * Cp * 2          # b1, b2, w2 (single-buffered)
               + 2 * tm_ * tk * 2                     # x tile, double-buffered
               + 2 * tm_ * Cp * out_bytes             # out tile, double-buffered
               + tm_ * H * 4                          # f32 h accumulator scratch
               + tm_ * H * 2 + 2 * tm_ * Cp * 4)      # bf16 h copy + logits/exp temps
        vmem_limit = int(min(64 << 20, max(16 << 20, 2 * est)))

        cost = pl.CostEstimate(
            flops=2 * Bp * (Fp * H + H * Cp),
            transcendentals=Bp * Cp,
            bytes_accessed=2 * (Bp * Fp + Fp * H + H * Cp)
                           + 4 * (H + Cp) + out_bytes * Bp * Cp,
        )

        if gK == 1:
            w1_spec = pl.BlockSpec((tk, H), lambda i, k: (k, 0),
                                   pipeline_mode=single)
        else:
            w1_spec = pl.BlockSpec((tk, H), lambda i, k: (k, 0))

        out = pl.pallas_call(
            _mlp_softmax_kernel,
            out_shape=jax.ShapeDtypeStruct((Bp, Cp), out_dtype),
            grid=(gB, gK),
            in_specs=[
                pl.BlockSpec((tm_, tk), lambda i, k: (i, k)),    # x tile (pipelined)
                w1_spec,                                         # w1 (resident / K-tiled)
                pl.BlockSpec((1, H), lambda i, k: (0, 0), pipeline_mode=single),
                pl.BlockSpec((H, Cp), lambda i, k: (0, 0), pipeline_mode=single),
                pl.BlockSpec((1, Cp), lambda i, k: (0, 0), pipeline_mode=single),
            ],
            out_specs=pl.BlockSpec((tm_, Cp), lambda i, k: (i, 0)),
            scratch_shapes=[pltpu.VMEM((tm_, H), jnp.float32)],
            compiler_params=pltpu.CompilerParams(
                dimension_semantics=("parallel", "arbitrary"),
                vmem_limit_bytes=vmem_limit),
            cost_estimate=cost,
        )(xp, w1f, b1f, w2p, b2p)

        return out[:B, :C]

    return forward


def multi_classification_type_forward(x, params, **kwargs):
    """Convenience one-shot wrapper (prefer make_multi_classification_forward)."""
    return make_multi_classification_forward(params, **kwargs)(x)


# ----------------------------------------------------------------------------
# Synthetic params + pure-JAX reference
# ----------------------------------------------------------------------------
def init_params(key, feature_size, distortion_type_len, hidden=512):
    """PyTorch Linear weights are (out, in); kept pre-transposed as (in, out)."""
    k1, k2, k3, k4, k5, k6 = jax.random.split(key, 6)
    w1 = jax.random.normal(k1, (feature_size, hidden), jnp.float32) * 0.05
    b1 = jax.random.normal(k2, (hidden,), jnp.float32) * 0.01
    w2 = jax.random.normal(k3, (hidden, distortion_type_len), jnp.float32) * 0.05
    b2 = jax.random.normal(k4, (distortion_type_len,), jnp.float32) * 0.01
    gamma = jnp.ones((hidden,), jnp.float32)
    beta = jnp.zeros((hidden,), jnp.float32)
    run_mean = jax.random.normal(k5, (hidden,), jnp.float32) * 0.1
    run_var = jnp.abs(jax.random.normal(k6, (hidden,), jnp.float32)) * 0.1 + 1.0
    return dict(w1=w1, b1=b1, gamma=gamma, beta=beta,
                run_mean=run_mean, run_var=run_var, w2=w2, b2=b2)


def _reference_forward(x, params):
    """Pure-JAX f32 reference of the PyTorch forward (eval mode)."""
    eps = 1e-5
    h = x @ params["w1"] + params["b1"]
    h = (h - params["run_mean"]) / jnp.sqrt(params["run_var"] + eps)
    h = h * params["gamma"] + params["beta"]
    h = jnp.maximum(h, 0.0)
    logits = h @ params["w2"] + params["b2"]
    return jax.nn.softmax(logits, axis=1)


if __name__ == "__main__":
    feature_size = 32
    distortion_type_len = 8

    key = jax.random.PRNGKey(0)
    kx, kp, kx2 = jax.random.split(key, 3)
    params = init_params(kp, feature_size, distortion_type_len)

    # Test 1: small batch, f32 output (exact row-normalization).
    batch = 8
    x = jax.random.normal(kx, (batch, feature_size), jnp.float32)
    forward_f32 = make_multi_classification_forward(params)
    out = jax.block_until_ready(forward_f32(x))
    ref = _reference_forward(x, params)
    assert out.shape == (batch, distortion_type_len)
    assert jnp.allclose(jnp.sum(out, axis=1), 1.0, atol=2e-3)
    assert jnp.allclose(out, ref, atol=3e-2)

    # Test 2: batch that exercises padding + even 2-step grid, bf16 output path.
    batch2 = 20
    x2 = jax.random.normal(kx2, (batch2, feature_size), jnp.float32)
    forward_bf16 = make_multi_classification_forward(params, out_dtype=jnp.bfloat16)
    out2 = jax.block_until_ready(forward_bf16(x2)).astype(jnp.float32)
    ref2 = _reference_forward(x2, params)
    assert out2.shape == (batch2, distortion_type_len)
    assert jnp.allclose(jnp.sum(out2, axis=1), 1.0, atol=1e-2)
    assert jnp.allclose(out2, ref2, atol=3e-2)

    print("KERNEL_OK")
</pallas_src>

<mosaic_0001>
module attributes {stable_mosaic.version = 11 : i64} {
  func.func @_mlp_softmax_kernel(%arg0: i32, %arg1: i32, %arg2: memref<8x32xbf16, #tpu.memory_space<vmem>>, %arg3: memref<32x512xbf16, #tpu.memory_space<vmem>>, %arg4: memref<1x512xf32, #tpu.memory_space<vmem>>, %arg5: memref<512x128xbf16, #tpu.memory_space<vmem>>, %arg6: memref<1x128xf32, #tpu.memory_space<vmem>>, %arg7: memref<8x128xf32, #tpu.memory_space<vmem>>, %arg8: memref<8x512xf32, #tpu.memory_space<vmem>>) attributes {dimension_semantics = [#tpu.dimension_semantics<parallel>, #tpu.dimension_semantics<arbitrary>], iteration_bounds = array<i64: 1, 1>, scalar_prefetch = 0 : i64, scratch_operands = 1 : i64, tpu.core_type = #tpu.core_type<tc>, window_params = [{transform_indices = @transform_0, window_bounds = array<i64: 8, 32>}, {pipeline_mode = #tpu.pipeline_mode<synchronous>, transform_indices = @transform_1, window_bounds = array<i64: 32, 512>}, {pipeline_mode = #tpu.pipeline_mode<synchronous>, transform_indices = @transform_2, window_bounds = array<i64: 1, 512>}, {pipeline_mode = #tpu.pipeline_mode<synchronous>, transform_indices = @transform_3, window_bounds = array<i64: 512, 128>}, {pipeline_mode = #tpu.pipeline_mode<synchronous>, transform_indices = @transform_4, window_bounds = array<i64: 1, 128>}, {transform_indices = @transform_5, window_bounds = array<i64: 8, 128>}]} {
    %c0_i32 = arith.constant 0 : i32
    %0 = arith.cmpi eq, %arg1, %c0_i32 : i32
    %1 = arith.extui %0 : i1 to i32
    %c0_i32_0 = arith.constant 0 : i32
    %2 = arith.cmpi ne, %1, %c0_i32_0 : i32
    scf.if %2 {
      %cst_10 = arith.constant 0.000000e+00 : f32
      %12 = vector.broadcast %cst_10 : f32 to vector<8x512xf32>
      %c0_11 = arith.constant 0 : index
      %c0_12 = arith.constant 0 : index
      %13 = vector.load %arg8[%c0_11, %c0_12] : memref<8x512xf32, #tpu.memory_space<vmem>>, vector<8x512xf32>
      tpu.vector_store %arg8[%c0_11, %c0_12], %12 {strides = array<i32>} : memref<8x512xf32, #tpu.memory_space<vmem>>, vector<8x512xf32>,
    } else {
    }
    %c0 = arith.constant 0 : index
    %c0_1 = arith.constant 0 : index
    %3 = vector.load %arg8[%c0, %c0_1] : memref<8x512xf32, #tpu.memory_space<vmem>>, vector<8x512xf32>
    %c0_2 = arith.constant 0 : index
    %c0_3 = arith.constant 0 : index
    %4 = vector.load %arg2[%c0_2, %c0_3] : memref<8x32xbf16, #tpu.memory_space<vmem>>, vector<8x32xbf16>
    %c0_4 = arith.constant 0 : index
    %c0_5 = arith.constant 0 : index
    %5 = vector.load %arg3[%c0_4, %c0_5] : memref<32x512xbf16, #tpu.memory_space<vmem>>, vector<32x512xbf16>
    %cst = arith.constant dense<0.000000e+00> : vector<8x512xf32>
    %6 = tpu.matmul %4, %5, %cst {dimension_numbers = #tpu.dot_dimension_numbers<[1], [0], [0], [1], [0, 0, 1, 1], [], []>} : vector<8x32xbf16>, vector<32x512xbf16>, vector<8x512xf32> -> vector<8x512xf32>
    %7 = arith.addf %3, %6 : vector<8x512xf32>
    %c0_6 = arith.constant 0 : index
    %c0_7 = arith.constant 0 : index
    %8 = vector.load %arg8[%c0_6, %c0_7] : memref<8x512xf32, #tpu.memory_space<vmem>>, vector<8x512xf32>
    tpu.vector_store %arg8[%c0_6, %c0_7], %7 {strides = array<i32>} : memref<8x512xf32, #tpu.memory_space<vmem>>, vector<8x512xf32>,
    %c0_i32_8 = arith.constant 0 : i32
    %9 = arith.cmpi eq, %arg1, %c0_i32_8 : i32
    %10 = arith.extui %9 : i1 to i32
    %c0_i32_9 = arith.constant 0 : i32
    %11 = arith.cmpi ne, %10, %c0_i32_9 : i32
    scf.if %11 {
      %c0_10 = arith.constant 0 : index
      %c0_11 = arith.constant 0 : index
      %12 = vector.load %arg8[%c0_10, %c0_11] : memref<8x512xf32, #tpu.memory_space<vmem>>, vector<8x512xf32>
      %c0_12 = arith.constant 0 : index
      %c0_13 = arith.constant 0 : index
      %13 = vector.load %arg4[%c0_12, %c0_13] : memref<1x512xf32, #tpu.memory_space<vmem>>, vector<1x512xf32>
      %14 = vector.broadcast %13 : vector<1x512xf32> to vector<8x512xf32>
      %15 = arith.addf %12, %14 : vector<8x512xf32>
      %cst_14 = arith.constant 0.000000e+00 : f32
      %16 = vector.broadcast %cst_14 : f32 to vector<8x512xf32>
      %17 = arith.maximumf %15, %16 : vector<8x512xf32>
      %18 = arith.truncf %17 : vector<8x512xf32> to vector<8x512xbf16>
      %c0_15 = arith.constant 0 : index
      %c0_16 = arith.constant 0 : index
      %19 = vector.load %arg5[%c0_15, %c0_16] : memref<512x128xbf16, #tpu.memory_space<vmem>>, vector<512x128xbf16>
      %cst_17 = arith.constant dense<0.000000e+00> : vector<8x128xf32>
      %20 = tpu.matmul %18, %19, %cst_17 {dimension_numbers = #tpu.dot_dimension_numbers<[1], [0], [0], [1], [0, 0, 1, 1], [], []>} : vector<8x512xbf16>, vector<512x128xbf16>, vector<8x128xf32> -> vector<8x128xf32>
      %c0_18 = arith.constant 0 : index
      %c0_19 = arith.constant 0 : index
      %21 = vector.load %arg6[%c0_18, %c0_19] : memref<1x128xf32, #tpu.memory_space<vmem>>, vector<1x128xf32>
      %22 = vector.broadcast %21 : vector<1x128xf32> to vector<8x128xf32>
      %23 = arith.addf %20, %22 : vector<8x128xf32>
      %cst_20 = arith.constant dense<0xFF800000> : vector<8xf32>
      %24 = vector.multi_reduction <maximumf>, %23, %cst_20 [1] : vector<8x128xf32> to vector<8xf32>
      %25 = vector.shape_cast %24 : vector<8xf32> to vector<8x1xf32>
      %26 = vector.broadcast %25 : vector<8x1xf32> to vector<8x128xf32>
      %27 = arith.subf %23, %26 : vector<8x128xf32>
      %28 = math.exp %27 : vector<8x128xf32>
      %cst_21 = arith.constant dense<0.000000e+00> : vector<8xf32>
      %29 = vector.multi_reduction <add>, %28, %cst_21 [1] : vector<8x128xf32> to vector<8xf32>
      %30 = vector.shape_cast %29 : vector<8xf32> to vector<8x1xf32>
      %cst_22 = arith.constant 1.000000e+00 : f32
      %31 = vector.broadcast %cst_22 : f32 to vector<8x1xf32>
      %32 = arith.divf %31, %30 : vector<8x1xf32>
      %33 = vector.broadcast %32 : vector<8x1xf32> to vector<8x128xf32>
      %34 = arith.mulf %28, %33 : vector<8x128xf32>
      %c0_23 = arith.constant 0 : index
      %c0_24 = arith.constant 0 : index
      %35 = vector.load %arg7[%c0_23, %c0_24] : memref<8x128xf32, #tpu.memory_space<vmem>>, vector<8x128xf32>
      tpu.vector_store %arg7[%c0_23, %c0_24], %34 {strides = array<i32>} : memref<8x128xf32, #tpu.memory_space<vmem>>, vector<8x128xf32>,
    } else {
    }
    return
  }
  func.func @transform_0(%arg0: i32, %arg1: i32) -> (i32, i32) {
    %c0_i32 = arith.constant 0 : i32
    return %arg0, %arg1 : i32, i32
  }
  func.func @transform_1(%arg0: i32, %arg1: i32) -> (i32, i32) {
    %c0_i32 = arith.constant 0 : i32
    %c0_i32_0 = arith.constant 0 : i32
    return %arg1, %c0_i32 : i32, i32
  }
  func.func @transform_2(%arg0: i32, %arg1: i32) -> (i32, i32) {
    %c0_i32 = arith.constant 0 : i32
    %c0_i32_0 = arith.constant 0 : i32
    %c0_i32_1 = arith.constant 0 : i32
    return %c0_i32, %c0_i32_0 : i32, i32
  }
  func.func @transform_3(%arg0: i32, %arg1: i32) -> (i32, i32) {
    %c0_i32 = arith.constant 0 : i32
    %c0_i32_0 = arith.constant 0 : i32
    %c0_i32_1 = arith.constant 0 : i32
    return %c0_i32, %c0_i32_0 : i32, i32
  }
  func.func @transform_4(%arg0: i32, %arg1: i32) -> (i32, i32) {
    %c0_i32 = arith.constant 0 : i32
    %c0_i32_0 = arith.constant 0 : i32
    %c0_i32_1 = arith.constant 0 : i32
    return %c0_i32, %c0_i32_0 : i32, i32
  }
  func.func @transform_5(%arg0: i32, %arg1: i32) -> (i32, i32) {
    %c0_i32 = arith.constant 0 : i32
    %c0_i32_0 = arith.constant 0 : i32
    return %arg0, %c0_i32 : i32, i32
  }
}

</mosaic_0001>

<llo_original>
// kernel: forward.1
$region0: #{forward.1}
  #allocation0 [shape = 'u32[]', space=smem, size = 0x4, offset = 0x4, fixed_abs, tag = 'smem constant byte address 0x4 - core index']
  #allocation1 [shape = 'u32[144,128]{1,0:T(1,128)}', space=vmem, size = 0x12000, scoped, tag = 'internal scratch']
  #allocation2 [shape = 'f32[8,512]{1,0:T(8,128)}', space=vmem, size = 0x4000, scoped, tag = 'scratch operand']
  %s0 = inlined_call_operand.vmem [shape: bf16[8,32], index: 0, kind: input, shape index: {}]
  %s1 = inlined_call_operand.hbm [shape: bf16[32,512], index: 1, kind: input, shape index: {}]
  %s2 = inlined_call_operand.vmem [shape: f32[1,512], index: 2, kind: input, shape index: {}]
  %s3 = inlined_call_operand.hbm [shape: bf16[512,128], index: 3, kind: input, shape index: {}]
  %s4 = inlined_call_operand.vmem [shape: f32[1,128], index: 4, kind: input, shape index: {}]
  %s5 = inlined_call_operand.hbm [shape: f32[8,128], index: 5, kind: output, shape index: {}]
  %s6 = sld [smem:[#allocation0]]
  $region46: #{forward.1} parent=0
    _
  %s8 = ssub.s32 1, %s6
  %s9 = scalar_select 0, %s8, %s6
  $region1: #{forward.1} parent=0
    #allocation3 [shape = 'u8[32768]{0}', space=vmem, size = 0x8000, scoped, tag = 'input window, operand 1, single buffered']
    #allocation4 [shape = 's32[1]{0}', space=sflag, size = 0x4, scoped, tag = 'scoped memory for forward.1']
    #allocation5 [shape = 's32[1]{0}', space=sflag, size = 0x4, scoped, tag = 'scoped memory for forward.1']
    #allocation6 [shape = 'u8[131072]{0}', space=vmem, size = 0x20000, scoped, tag = 'input window, operand 3, single buffered']
    #allocation7 [shape = 's32[1]{0}', space=sflag, size = 0x4, scoped, tag = 'scoped memory for forward.1']
    #allocation8 [shape = 'u8[4096]{0}', space=vmem, size = 0x1000, scoped, tag = 'output window, operand 0, single buffered']
    %10 = vsyncpa [#allocation4], 0
    %11 = vsyncpa [#allocation7], 0
    %12 = vsyncpa [#allocation5], 0
    // Predicated region
    $region2: #{forward.1} parent=1 // pred_check
      _
    $region3: #{forward.1} parent=1 // pred_check_branch
      %14 = sbr.rel (0) target = $region5
    $region4: #{forward.1} parent=1 // pred_region
      _
    $region5: #{forward.1} parent=1 // pred_fallthru
      _
    // Predicated region
    $region6: #{forward.1} parent=1 // pred_check
      _
    $region7: #{forward.1} parent=1 // pred_check_branch
      %16 = sbr.rel (0) target = $region9
    $region8: #{forward.1} parent=1 // pred_region
      %s18 = ssub.s32 1024, 1024
      %19 = vsyncadd [#allocation4], %s18
      %s20 = sshll.u32 [#allocation3], 4
      %s21 = int_to_ptr.vmem [resolvable:$true] %s20
      %26 = dma.hbm_to_vmem [thread:$0]  %s1, 1024, %s21, [#allocation4], 256, 256, 16
    $region9: #{forward.1} parent=1 // pred_fallthru
      _
    // Predicated region
    $region10: #{forward.1} parent=1 // pred_check
      _
    $region11: #{forward.1} parent=1 // pred_check_branch
      %28 = sbr.rel (0) target = $region13
    $region12: #{forward.1} parent=1 // pred_region
      _
    $region13: #{forward.1} parent=1 // pred_fallthru
      _
    // Predicated region
    $region14: #{forward.1} parent=1 // pred_check
      _
    $region15: #{forward.1} parent=1 // pred_check_branch
      %30 = sbr.rel (0) target = $region17
    $region16: #{forward.1} parent=1 // pred_region
      %s32 = ssub.s32 4096, 4096
      %33 = vsyncadd [#allocation7], %s32
      %s34 = sshll.u32 [#allocation6], 4
      %s35 = int_to_ptr.vmem [resolvable:$true] %s34
      %40 = dma.hbm_to_vmem [thread:$0]  %s3, 4096, %s35, [#allocation7], 64, 64, 4
    $region17: #{forward.1} parent=1 // pred_fallthru
      _
    // Predicated region
    $region18: #{forward.1} parent=1 // pred_check
      _
    $region19: #{forward.1} parent=1 // pred_check_branch
      %42 = sbr.rel (0) target = $region21
    $region20: #{forward.1} parent=1 // pred_region
      _
    $region21: #{forward.1} parent=1 // pred_fallthru
      _
    // Predicated region
    $region22: #{forward.1} parent=1 // pred_check
      _
    $region23: #{forward.1} parent=1 // pred_check_branch
      %44 = sbr.rel (0) target = $region25
    $region24: #{forward.1} parent=1 // pred_region
      %45 = dma.done [#allocation4], 1024
    $region25: #{forward.1} parent=1 // pred_fallthru
      _
    // Predicated region
    $region26: #{forward.1} parent=1 // pred_check
      _
    $region27: #{forward.1} parent=1 // pred_check_branch
      %47 = sbr.rel (0) target = $region29
    $region28: #{forward.1} parent=1 // pred_region
      %48 = dma.done [#allocation7], 4096
    $region29: #{forward.1} parent=1 // pred_fallthru
      _
    %p50 = scmp.eq.s32.totalorder 0, 0
    // Predicated region
    $region30: #{forward.1} parent=1 // pred_check
      %p51 = pneg %p50
    $region31: #{forward.1} parent=1 // pred_check_branch
      %53 = sbr.rel (%p51) target = $region33
    $region32: #{forward.1} parent=1 // pred_region
      %54 = vst [vmem:[#allocation2] sm:$0xff] 0.0
      %55 = vst [vmem:[#allocation2 + $0x8] sm:$0xff] 0.0
      %56 = vst [vmem:[#allocation2 + $0x10] sm:$0xff] 0.0
      %57 = vst [vmem:[#allocation2 + $0x18] sm:$0xff] 0.0
    $region33: #{forward.1} parent=1 // pred_fallthru
      _
    %v58 = vld [vmem:[#allocation2] sm:$0xff]
    %v59 = vld [vmem:[#allocation2 + $0x8] sm:$0xff]
    %v60 = vld [vmem:[#allocation2 + $0x10] sm:$0xff]
    %v61 = vld [vmem:[#allocation2 + $0x18] sm:$0xff]
    %v62 = vld [vmem:[%s0] sm:$0xf]
    %v63 = vld [vmem:[#allocation3] sm:$0xff]
    %v64 = vld [vmem:[#allocation3 + $0x8] sm:$0xff]
    %v65 = vld [vmem:[#allocation3 + $0x10] sm:$0xff]
    %v66 = vld [vmem:[#allocation3 + $0x18] sm:$0xff]
    %v67 = vld [vmem:[#allocation3 + $0x20] sm:$0xff]
    %v68 = vld [vmem:[#allocation3 + $0x28] sm:$0xff]
    %v69 = vld [vmem:[#allocation3 + $0x30] sm:$0xff]
    %v70 = vld [vmem:[#allocation3 + $0x38] sm:$0xff]
    %v79 = vunpack.c.l.b16 %v63
    %v80 = vunpack.c.h.b16 %v63
    %v81 = vunpack.c.l.b16 %v64
    %v82 = vunpack.c.h.b16 %v64
    %v83 = vunpack.c.l.b16 %v65
    %v84 = vunpack.c.h.b16 %v65
    %v85 = vunpack.c.l.b16 %v66
    %v86 = vunpack.c.h.b16 %v66
    %v87 = vunpack.c.l.b16 %v67
    %v88 = vunpack.c.h.b16 %v67
    %v89 = vunpack.c.l.b16 %v68
    %v90 = vunpack.c.h.b16 %v68
    %v91 = vunpack.c.l.b16 %v69
    %v92 = vunpack.c.h.b16 %v69
    %v93 = vunpack.c.l.b16 %v70
    %v94 = vunpack.c.h.b16 %v70
    %v95 = vpack.c.b16 %v83, %v79
    %v96 = vpack.c.b16 %v84, %v80
    %v97 = vpack.c.b16 %v85, %v81
    %v98 = vpack.c.b16 %v86, %v82
    %v99 = vpack.c.b16 %v91, %v87
    %v100 = vpack.c.b16 %v92, %v88
    %v101 = vpack.c.b16 %v93, %v89
    %v102 = vpack.c.b16 %v94, %v90
    %vm111 = vcmask 261120
    %v113 = vsel %vm111, %v62, 0
    %115 = vmatprep.subr.bf16.mxu0 0
    %116 = vmatpush1.bf16.msra.mxu0 0
    %117 = vmatprep.subr.bf16.mxu0 0
    %118 = vmatpush1.bf16.msra.mxu0 0
    %119 = vmatprep.subr.bf16.mxu0 0
    %120 = vmatpush1.bf16.msra.mxu0 0
    %121 = vmatprep.subr.bf16.mxu0 0
    %122 = vmatpush1.bf16.msra.mxu0 0
    %123 = vmatprep.subr.bf16.mxu0 0
    %124 = vmatpush1.bf16.msra.mxu0 0
    %125 = vmatprep.subr.bf16.mxu0 0
    %126 = vmatpush1.bf16.msra.mxu0 0
    %127 = vmatprep.subr.bf16.mxu0 %v100
    %128 = vmatpush1.bf16.msra.mxu0 %v99
    %129 = vmatprep.subr.bf16.mxu0 %v96
    %130 = vmatpush1.bf16.msra.mxu0 %v95
    %131 = vmatprep.subr.bf16.mxu0 0
    %132 = vmatpush2.bf16.msra.mxu0 0
    %133 = vmatprep.subr.bf16.mxu0 0
    %134 = vmatpush2.bf16.msra.mxu0 0
    %135 = vmatprep.subr.bf16.mxu0 0
    %136 = vmatpush2.bf16.msra.mxu0 0
    %137 = vmatprep.subr.bf16.mxu0 0
    %138 = vmatpush2.bf16.msra.mxu0 0
    %139 = vmatprep.subr.bf16.mxu0 0
    %140 = vmatpush2.bf16.msra.mxu0 0
    %141 = vmatprep.subr.bf16.mxu0 0
    %142 = vmatpush2.bf16.msra.mxu0 0
    %143 = vmatprep.subr.bf16.mxu0 0
    %144 = vmatpush2.bf16.msra.mxu0 0
    %145 = vmatprep.subr.bf16.mxu0 0
    %146 = vmatpush2.bf16.msra.mxu0 0
    %147 = vmatprep.mubr.bf16.mxu0 0
    %148 = vmatmul.mubr.bf16.gmra.mxu0 %v113
    %v149 = vpop.f32.mrf.mxu0
    %v150 = vadd.f32 0.0, %v149
    %v151 = vpop.f32.mrf.mxu0
    %v152 = vadd.f32 0.0, %v151
    %v153 = vpop.f32.mrf.mxu0
    %v154 = vpop.f32.mrf.mxu0
    %155 = vdwg.mxu0
    %156 = vmatprep.subr.bf16.mxu0 0
    %157 = vmatpush1.bf16.msra.mxu0 0
    %158 = vmatprep.subr.bf16.mxu0 0
    %159 = vmatpush1.bf16.msra.mxu0 0
    %160 = vmatprep.subr.bf16.mxu0 0
    %161 = vmatpush1.bf16.msra.mxu0 0
    %162 = vmatprep.subr.bf16.mxu0 0
    %163 = vmatpush1.bf16.msra.mxu0 0
    %164 = vmatprep.subr.bf16.mxu0 0
    %165 = vmatpush1.bf16.msra.mxu0 0
    %166 = vmatprep.subr.bf16.mxu0 0
    %167 = vmatpush1.bf16.msra.mxu0 0
    %168 = vmatprep.subr.bf16.mxu0 %v102
    %169 = vmatpush1.bf16.msra.mxu0 %v101
    %170 = vmatprep.subr.bf16.mxu0 %v98
    %171 = vmatpush1.bf16.msra.mxu0 %v97
    %172 = vmatprep.subr.bf16.mxu0 0
    %173 = vmatpush2.bf16.msra.mxu0 0
    %174 = vmatprep.subr.bf16.mxu0 0
    %175 = vmatpush2.bf16.msra.mxu0 0
    %176 = vmatprep.subr.bf16.mxu0 0
    %177 = vmatpush2.bf16.msra.mxu0 0
    %178 = vmatprep.subr.bf16.mxu0 0
    %179 = vmatpush2.bf16.msra.mxu0 0
    %180 = vmatprep.subr.bf16.mxu0 0
    %181 = vmatpush2.bf16.msra.mxu0 0
    %182 = vmatprep.subr.bf16.mxu0 0
    %183 = vmatpush2.bf16.msra.mxu0 0
    %184 = vmatprep.subr.bf16.mxu0 0
    %185 = vmatpush2.bf16.msra.mxu0 0
    %186 = vmatprep.subr.bf16.mxu0 0
    %187 = vmatpush2.bf16.msra.mxu0 0
    %188 = vmatprep.mubr.bf16.mxu0 0
    %189 = vmatmul.mubr.bf16.gmra.mxu0 %v113
    %v190 = vpop.f32.mrf.mxu0
    %v191 = vadd.f32 0.0, %v190
    %v192 = vpop.f32.mrf.mxu0
    %v193 = vadd.f32 0.0, %v192
    %v194 = vpop.f32.mrf.mxu0
    %v195 = vpop.f32.mrf.mxu0
    %196 = vdwg.mxu0
    %v197 = vadd.f32 %v58, %v150
    %v198 = vadd.f32 %v59, %v152
    %v199 = vadd.f32 %v60, %v191
    %v200 = vadd.f32 %v61, %v193
    %201 = vst [vmem:[#allocation2] sm:$0xff] %v197
    %202 = vst [vmem:[#allocation2 + $0x8] sm:$0xff] %v198
    %203 = vst [vmem:[#allocation2 + $0x10] sm:$0xff] %v199
    %204 = vst [vmem:[#allocation2 + $0x18] sm:$0xff] %v200
    // Predicated region
    $region34: #{forward.1} parent=1 // pred_check
      %p205 = pneg %p50
    $region35: #{forward.1} parent=1 // pred_check_branch
      %207 = sbr.rel (%p205) target = $region37
    $region36: #{forward.1} parent=1 // pred_region
      %v208 = vld [vmem:[#allocation2] sm:$0xff]
      %v209 = vld [vmem:[#allocation2 + $0x8] sm:$0xff]
      %v210 = vld [vmem:[#allocation2 + $0x10] sm:$0xff]
      %v211 = vld [vmem:[#allocation2 + $0x18] sm:$0xff]
      %v212 = vld [vmem:[%s2] sm:$0xf]
      %v214 = vlaneseq
      %v215 = vshrl.u32 %v214, 7
      %v216 = vsub.s32 0, %v215
      %v217 = vrot.slane %v212, %v216
      %v218 = vlaneseq
      %v219 = vshrl.u32 %v218, 7
      %v220 = vsub.s32 1, %v219
      %v221 = vrot.slane %v212, %v220
      %v222 = vlaneseq
      %v223 = vshrl.u32 %v222, 7
      %v224 = vsub.s32 2, %v223
      %v225 = vrot.slane %v212, %v224
      %v226 = vlaneseq
      %v227 = vshrl.u32 %v226, 7
      %v228 = vsub.s32 3, %v227
      %v229 = vrot.slane %v212, %v228
      %v234 = vadd.f32 %v208, %v217
      %v235 = vadd.f32 %v209, %v221
      %v236 = vadd.f32 %v210, %v225
      %v237 = vadd.f32 %v211, %v229
      %v238 = vmax.f32 %v234, 0.0
      %v239 = vmax.f32 %v235, 0.0
      %v240 = vmax.f32 %v236, 0.0
      %v241 = vmax.f32 %v237, 0.0
      %v242 = vpack.c.bf16 %v238, %v238
      %v243 = vpack.c.bf16 %v239, %v239
      %v244 = vpack.c.bf16 %v240, %v240
      %v245 = vpack.c.bf16 %v241, %v241
      %v246 = vld [vmem:[#allocation6] sm:$0xf]
      %v247 = vld [vmem:[#allocation6 + $0x4] sm:$0xf]
      %v248 = vld [vmem:[#allocation6 + $0x8] sm:$0xf]
      %v249 = vld [vmem:[#allocation6 + $0xc] sm:$0xf]
      %v250 = vld [vmem:[#allocation6 + $0x10] sm:$0xf]
      %v251 = vld [vmem:[#allocation6 + $0x14] sm:$0xf]
      %v252 = vld [vmem:[#allocation6 + $0x18] sm:$0xf]
      %v253 = vld [vmem:[#allocation6 + $0x1c] sm:$0xf]
      %v254 = vld [vmem:[#allocation6 + $0x20] sm:$0xf]
      %v255 = vld [vmem:[#allocation6 + $0x24] sm:$0xf]
      %v256 = vld [vmem:[#allocation6 + $0x28] sm:$0xf]
      %v257 = vld [vmem:[#allocation6 + $0x2c] sm:$0xf]
      %v258 = vld [vmem:[#allocation6 + $0x30] sm:$0xf]
      %v259 = vld [vmem:[#allocation6 + $0x34] sm:$0xf]
      %v260 = vld [vmem:[#allocation6 + $0x38] sm:$0xf]
      %v261 = vld [vmem:[#allocation6 + $0x3c] sm:$0xf]
      %v262 = vld [vmem:[#allocation6 + $0x40] sm:$0xf]
      %v263 = vld [vmem:[#allocation6 + $0x44] sm:$0xf]
      %v264 = vld [vmem:[#allocation6 + $0x48] sm:$0xf]
      %v265 = vld [vmem:[#allocation6 + $0x4c] sm:$0xf]
      %v266 = vld [vmem:[#allocation6 + $0x50] sm:$0xf]
      %v267 = vld [vmem:[#allocation6 + $0x54] sm:$0xf]
      %v268 = vld [vmem:[#allocation6 + $0x58] sm:$0xf]
      %v269 = vld [vmem:[#allocation6 + $0x5c] sm:$0xf]
      %v270 = vld [vmem:[#allocation6 + $0x60] sm:$0xf]
      %v271 = vld [vmem:[#allocation6 + $0x64] sm:$0xf]
      %v272 = vld [vmem:[#allocation6 + $0x68] sm:$0xf]
      %v273 = vld [vmem:[#allocation6 + $0x6c] sm:$0xf]
      %v274 = vld [vmem:[#allocation6 + $0x70] sm:$0xf]
      %v275 = vld [vmem:[#allocation6 + $0x74] sm:$0xf]
      %v276 = vld [vmem:[#allocation6 + $0x78] sm:$0xf]
      %v277 = vld [vmem:[#allocation6 + $0x7c] sm:$0xf]
      %v278 = vld [vmem:[#allocation6 + $0x80] sm:$0xf]
      %v279 = vld [vmem:[#allocation6 + $0x84] sm:$0xf]
      %v280 = vld [vmem:[#allocation6 + $0x88] sm:$0xf]
      %v281 = vld [vmem:[#allocation6 + $0x8c] sm:$0xf]
      %v282 = vld [vmem:[#allocation6 + $0x90] sm:$0xf]
      %v283 = vld [vmem:[#allocation6 + $0x94] sm:$0xf]
      %v284 = vld [vmem:[#allocation6 + $0x98] sm:$0xf]
      %v285 = vld [vmem:[#allocation6 + $0x9c] sm:$0xf]
      %v286 = vld [vmem:[#allocation6 + $0xa0] sm:$0xf]
      %v287 = vld [vmem:[#allocation6 + $0xa4] sm:$0xf]
      %v288 = vld [vmem:[#allocation6 + $0xa8] sm:$0xf]
      %v289 = vld [vmem:[#allocation6 + $0xac] sm:$0xf]
      %v290 = vld [vmem:[#allocation6 + $0xb0] sm:$0xf]
      %v291 = vld [vmem:[#allocation6 + $0xb4] sm:$0xf]
      %v292 = vld [vmem:[#allocation6 + $0xb8] sm:$0xf]
      %v293 = vld [vmem:[#allocation6 + $0xbc] sm:$0xf]
      %v294 = vld [vmem:[#allocation6 + $0xc0] sm:$0xf]
      %v295 = vld [vmem:[#allocation6 + $0xc4] sm:$0xf]
      %v296 = vld [vmem:[#allocation6 + $0xc8] sm:$0xf]
      %v297 = vld [vmem:[#allocation6 + $0xcc] sm:$0xf]
      %v298 = vld [vmem:[#allocation6 + $0xd0] sm:$0xf]
      %v299 = vld [vmem:[#allocation6 + $0xd4] sm:$0xf]
      %v300 = vld [vmem:[#allocation6 + $0xd8] sm:$0xf]
      %v301 = vld [vmem:[#allocation6 + $0xdc] sm:$0xf]
      %v302 = vld [vmem:[#allocation6 + $0xe0] sm:$0xf]
      %v303 = vld [vmem:[#allocation6 + $0xe4] sm:$0xf]
      %v304 = vld [vmem:[#allocation6 + $0xe8] sm:$0xf]
      %v305 = vld [vmem:[#allocation6 + $0xec] sm:$0xf]
      %v306 = vld [vmem:[#allocation6 + $0xf0] sm:$0xf]
      %v307 = vld [vmem:[#allocation6 + $0xf4] sm:$0xf]
      %v308 = vld [vmem:[#allocation6 + $0xf8] sm:$0xf]
      %v309 = vld [vmem:[#allocation6 + $0xfc] sm:$0xf]
      %v310 = vld [vmem:[%s4] sm:$0x1]
      %v312 = vlaneseq
      %v313 = vshrl.u32 %v312, 7
      %v314 = vsub.s32 0, %v313
      %v315 = vrot.slane %v310, %v314
      %v381 = vunpack.c.l.b16 %v246
      %v382 = vunpack.c.l.b16 %v247
      %v383 = vunpack.c.l.b16 %v248
      %v384 = vunpack.c.l.b16 %v249
      %v385 = vunpack.c.l.b16 %v250
      %v386 = vunpack.c.l.b16 %v251
      %v387 = vunpack.c.l.b16 %v252
      %v388 = vunpack.c.l.b16 %v253
      %v389 = vunpack.c.l.b16 %v254
      %v390 = vunpack.c.l.b16 %v255
      %v391 = vunpack.c.l.b16 %v256
      %v392 = vunpack.c.l.b16 %v257
      %v393 = vunpack.c.l.b16 %v258
      %v394 = vunpack.c.l.b16 %v259
      %v395 = vunpack.c.l.b16 %v260
      %v396 = vunpack.c.l.b16 %v261
      %v397 = vunpack.c.l.b16 %v262
      %v398 = vunpack.c.l.b16 %v263
      %v399 = vunpack.c.l.b16 %v264
      %v400 = vunpack.c.l.b16 %v265
      %v401 = vunpack.c.l.b16 %v266
      %v402 = vunpack.c.l.b16 %v267
      %v403 = vunpack.c.l.b16 %v268
      %v404 = vunpack.c.l.b16 %v269
      %v405 = vunpack.c.l.b16 %v270
      %v406 = vunpack.c.l.b16 %v271
      %v407 = vunpack.c.l.b16 %v272
      %v408 = vunpack.c.l.b16 %v273
      %v409 = vunpack.c.l.b16 %v274
      %v410 = vunpack.c.l.b16 %v275
      %v411 = vunpack.c.l.b16 %v276
      %v412 = vunpack.c.l.b16 %v277
      %v413 = vunpack.c.l.b16 %v278
      %v414 = vunpack.c.l.b16 %v279
      %v415 = vunpack.c.l.b16 %v280
      %v416 = vunpack.c.l.b16 %v281
      %v417 = vunpack.c.l.b16 %v282
      %v418 = vunpack.c.l.b16 %v283
      %v419 = vunpack.c.l.b16 %v284
      %v420 = vunpack.c.l.b16 %v285
      %v421 = vunpack.c.l.b16 %v286
      %v422 = vunpack.c.l.b16 %v287
      %v423 = vunpack.c.l.b16 %v288
      %v424 = vunpack.c.l.b16 %v289
      %v425 = vunpack.c.l.b16 %v290
      %v426 = vunpack.c.l.b16 %v291
      %v427 = vunpack.c.l.b16 %v292
      %v428 = vunpack.c.l.b16 %v293
      %v429 = vunpack.c.l.b16 %v294
      %v430 = vunpack.c.l.b16 %v295
      %v431 = vunpack.c.l.b16 %v296
      %v432 = vunpack.c.l.b16 %v297
      %v433 = vunpack.c.l.b16 %v298
      %v434 = vunpack.c.l.b16 %v299
      %v435 = vunpack.c.l.b16 %v300
      %v436 = vunpack.c.l.b16 %v301
      %v437 = vunpack.c.l.b16 %v302
      %v438 = vunpack.c.l.b16 %v303
      %v439 = vunpack.c.l.b16 %v304
      %v440 = vunpack.c.l.b16 %v305
      %v441 = vunpack.c.l.b16 %v306
      %v442 = vunpack.c.l.b16 %v307
      %v443 = vunpack.c.l.b16 %v308
      %v444 = vunpack.c.l.b16 %v309
      %v445 = vpack.c.b16 %v382, %v381
      %v446 = vpack.c.b16 %v384, %v383
      %v447 = vpack.c.b16 %v386, %v385
      %v448 = vpack.c.b16 %v388, %v387
      %v449 = vpack.c.b16 %v390, %v389
      %v450 = vpack.c.b16 %v392, %v391
      %v451 = vpack.c.b16 %v394, %v393
      %v452 = vpack.c.b16 %v396, %v395
      %v453 = vpack.c.b16 %v398, %v397
      %v454 = vpack.c.b16 %v400, %v399
      %v455 = vpack.c.b16 %v402, %v401
      %v456 = vpack.c.b16 %v404, %v403
      %v457 = vpack.c.b16 %v406, %v405
      %v458 = vpack.c.b16 %v408, %v407
      %v459 = vpack.c.b16 %v410, %v409
      %v460 = vpack.c.b16 %v412, %v411
      %v461 = vpack.c.b16 %v414, %v413
      %v462 = vpack.c.b16 %v416, %v415
      %v463 = vpack.c.b16 %v418, %v417
      %v464 = vpack.c.b16 %v420, %v419
      %v465 = vpack.c.b16 %v422, %v421
      %v466 = vpack.c.b16 %v424, %v423
      %v467 = vpack.c.b16 %v426, %v425
      %v468 = vpack.c.b16 %v428, %v427
      %v469 = vpack.c.b16 %v430, %v429
      %v470 = vpack.c.b16 %v432, %v431
      %v471 = vpack.c.b16 %v434, %v433
      %v472 = vpack.c.b16 %v436, %v435
      %v473 = vpack.c.b16 %v438, %v437
      %v474 = vpack.c.b16 %v440, %v439
      %v475 = vpack.c.b16 %v442, %v441
      %v476 = vpack.c.b16 %v444, %v443
      %509 = vmatprep.subr.bf16.mxu0 0
      %510 = vmatpush1.bf16.msra.mxu0 %v452
      %511 = vmatprep.subr.bf16.mxu0 0
      %512 = vmatpush1.bf16.msra.mxu0 %v451
      %513 = vmatprep.subr.bf16.mxu0 0
      %514 = vmatpush1.bf16.msra.mxu0 %v450
      %515 = vmatprep.subr.bf16.mxu0 0
      %516 = vmatpush1.bf16.msra.mxu0 %v449
      %517 = vmatprep.subr.bf16.mxu0 0
      %518 = vmatpush1.bf16.msra.mxu0 %v448
      %519 = vmatprep.subr.bf16.mxu0 0
      %520 = vmatpush1.bf16.msra.mxu0 %v447
      %521 = vmatprep.subr.bf16.mxu0 0
      %522 = vmatpush1.bf16.msra.mxu0 %v446
      %523 = vmatprep.subr.bf16.mxu0 0
      %524 = vmatpush1.bf16.msra.mxu0 %v445
      %525 = vmatprep.subr.bf16.mxu0 0
      %526 = vmatpush2.bf16.msra.mxu0 %v460
      %527 = vmatprep.subr.bf16.mxu0 0
      %528 = vmatpush2.bf16.msra.mxu0 %v459
      %529 = vmatprep.subr.bf16.mxu0 0
      %530 = vmatpush2.bf16.msra.mxu0 %v458
      %531 = vmatprep.subr.bf16.mxu0 0
      %532 = vmatpush2.bf16.msra.mxu0 %v457
      %533 = vmatprep.subr.bf16.mxu0 0
      %534 = vmatpush2.bf16.msra.mxu0 %v456
      %535 = vmatprep.subr.bf16.mxu0 0
      %536 = vmatpush2.bf16.msra.mxu0 %v455
      %537 = vmatprep.subr.bf16.mxu0 0
      %538 = vmatpush2.bf16.msra.mxu0 %v454
      %539 = vmatprep.subr.bf16.mxu0 0
      %540 = vmatpush2.bf16.msra.mxu0 %v453
      %541 = vmatprep.mubr.bf16.mxu0 %v243
      %542 = vmatmul.mubr.bf16.gmra.mxu0 %v242
      %v543 = vpop.f32.mrf.mxu0
      %v544 = vadd.f32 %v315, %v543
      %v545 = vpop.f32.mrf.mxu0
      %v546 = vpop.f32.mrf.mxu0
      %v547 = vpop.f32.mrf.mxu0
      %548 = vdwg.mxu0
      %549 = vmatprep.subr.bf16.mxu0 0
      %550 = vmatpush1.bf16.msra.mxu0 %v468
      %551 = vmatprep.subr.bf16.mxu0 0
      %552 = vmatpush1.bf16.msra.mxu0 %v467
      %553 = vmatprep.subr.bf16.mxu0 0
      %554 = vmatpush1.bf16.msra.mxu0 %v466
      %555 = vmatprep.subr.bf16.mxu0 0
      %556 = vmatpush1.bf16.msra.mxu0 %v465
      %557 = vmatprep.subr.bf16.mxu0 0
      %558 = vmatpush1.bf16.msra.mxu0 %v464
      %559 = vmatprep.subr.bf16.mxu0 0
      %560 = vmatpush1.bf16.msra.mxu0 %v463
      %561 = vmatprep.subr.bf16.mxu0 0
      %562 = vmatpush1.bf16.msra.mxu0 %v462
      %563 = vmatprep.subr.bf16.mxu0 0
      %564 = vmatpush1.bf16.msra.mxu0 %v461
      %565 = vmatprep.subr.bf16.mxu0 0
      %566 = vmatpush2.bf16.msra.mxu0 %v476
      %567 = vmatprep.subr.bf16.mxu0 0
      %568 = vmatpush2.bf16.msra.mxu0 %v475
      %569 = vmatprep.subr.bf16.mxu0 0
      %570 = vmatpush2.bf16.msra.mxu0 %v474
      %571 = vmatprep.subr.bf16.mxu0 0
      %572 = vmatpush2.bf16.msra.mxu0 %v473
      %573 = vmatprep.subr.bf16.mxu0 0
      %574 = vmatpush2.bf16.msra.mxu0 %v472
      %575 = vmatprep.subr.bf16.mxu0 0
      %576 = vmatpush2.bf16.msra.mxu0 %v471
      %577 = vmatprep.subr.bf16.mxu0 0
      %578 = vmatpush2.bf16.msra.mxu0 %v470
      %579 = vmatprep.subr.bf16.mxu0 0
      %580 = vmatpush2.bf16.msra.mxu0 %v469
      %581 = vmatprep.mubr.bf16.mxu0 %v245
      %582 = vmatmul.mubr.bf16.gmra.mxu0 %v244
      %v583 = vpop.f32.mrf.mxu0
      %v584 = vadd.f32 %v544, %v583
      %v585 = vpop.f32.mrf.mxu0
      %v586 = vpop.f32.mrf.mxu0
      %v587 = vpop.f32.mrf.mxu0
      %588 = vdwg.mxu0
      %589 = vmax.xlane.f32.xlu0 %v584
      %v590 = vpop.xlane.xlu0 %589
      %v591 = vsub.f32 %v584, %v590
      %v592 = vmul.f32 %v591, 1.442695
      %v593 = vpow.pop %v592
      %594 = vadd.xlane.f32.xlu0 %v593
      %v595 = vpop.xlane.xlu0 %594
      %v596 = vrcp.pop %v595
      %v597 = vmul.f32 1.0, %v596
      %v598 = vmul.f32 %v593, %v597
      %599 = vst [vmem:[#allocation8] sm:$0xff] %v598
    $region37: #{forward.1} parent=1 // pred_fallthru
      _
    // Predicated region
    $region38: #{forward.1} parent=1 // pred_check
      _
    $region39: #{forward.1} parent=1 // pred_check_branch
      %601 = sbr.rel (0) target = $region41
    $region40: #{forward.1} parent=1 // pred_region
      %s603 = ssub.s32 128, 128
      %604 = vsyncadd [#allocation5], %s603
      %s606 = sshll.u32 [#allocation8], 4
      %s607 = int_to_ptr.vmem [resolvable:$true] %s606
      %609 = dma.vmem_to_hbm [thread:$0]  %s607, 128, %s5, [#allocation5]
    $region41: #{forward.1} parent=1 // pred_fallthru
      _
    // Predicated region
    $region42: #{forward.1} parent=1 // pred_check
      _
    $region43: #{forward.1} parent=1 // pred_check_branch
      %611 = sbr.rel (0) target = $region45
    $region44: #{forward.1} parent=1 // pred_region
      %612 = dma.done [#allocation5], 128
    $region45: #{forward.1} parent=1 // pred_fallthru
      _
    %613 = vsyncpa [#allocation4], 1
    %614 = vsyncpa [#allocation7], 1
    %615 = vsyncpa [#allocation5], 1

</llo_original>
